<compile_context>
chip_gen: v7x
topology: tpu7x:2x2x1
jax: 0.10.0
libtpu: 0.0.40
codegen_flags: <defaults>
</compile_context>

<pallas_src>
import jax
import jax.numpy as jnp
from jax import lax
from jax.experimental import pallas as pl
from jax.experimental.pallas import tpu as pltpu

EPS = 1e-5               # nn.BatchNorm2d default eps

# Set to jnp.bfloat16 for production on v5e/v6e/v7x to hit the MXU bf16 rate
# and halve matmul-operand bytes (keep elementwise BN/ReLU math in f32).
# Kept at f32 here so the check against the f32 reference stays tight.
_MXU_DTYPE = jnp.float32


def _dot(a, b):
    return jnp.dot(a.astype(_MXU_DTYPE), b.astype(_MXU_DTYPE),
                   preferred_element_type=jnp.float32)


def _colsum(v):
    """Sum over every axis except the last (channel) axis -> [1, C]."""
    while v.ndim > 2:
        v = jnp.sum(v, axis=0)
    return jnp.sum(v, axis=0, keepdims=True)


# ----------------------------- Pallas kernels -----------------------------

def _stats_shortcut_kernel(xpar_ref, wsc_ref, ysc_ref, xstat_ref, scstat_ref):
    """Pass 1: bn1 batch stats of x + shortcut 1x1/stride-2 conv and its stats.

    xpar is the zero-padded input, parity-decomposed and folded into the
    channel axis: [H2+1, W2+1, 4*Cin].  The (odd,odd) parity slab (channels
    3*Cin:4*Cin, rows/cols :H2/:W2) is exactly x[::2, ::2, :].  The shortcut
    conv bias is dropped: it feeds training-mode BN and cancels exactly.
    """
    xq = xpar_ref[0]                                   # [H2+1, W2+1, 4*Cin]
    cin = wsc_ref.shape[0]
    oh = xq.shape[0] - 1
    ow = xq.shape[1] - 1
    # Padding entries are exact zeros -> they contribute nothing to sum/sumsq.
    xstat_ref[0, 0:1, :] = _colsum(xq)
    xstat_ref[0, 1:2, :] = _colsum(xq * xq)
    xs = xq[:oh, :ow, 3 * cin:4 * cin].reshape(oh * ow, cin)
    ysc = _dot(xs, wsc_ref[...])                       # [H2*W2, Cin]
    ysc_ref[0] = ysc.astype(ysc_ref.dtype)
    scstat_ref[0, 0:1, :] = jnp.sum(ysc, axis=0, keepdims=True)
    scstat_ref[0, 1:2, :] = jnp.sum(ysc * ysc, axis=0, keepdims=True)


def _conv1_kernel(xpar_ref, mask_ref, scale_ref, shift_ref, w1_ref,
                  y1_ref, y1stat_ref):
    """Pass 2: y1 = conv1(relu(bn1(x))), plus bn2 batch stats of y1.

    bn1 is applied on the fly as a per-channel scale/shift; the mask restores
    exact zeros on the conv-padding ring (relu(shift) != 0 there otherwise).
    conv1 is 9 accumulating tap matmuls; conv1's bias feeds bn2 and is dead.
    """
    xq = xpar_ref[0]                                   # [H2+1, W2+1, 4*Cin]
    cin = w1_ref.shape[1]
    cout = w1_ref.shape[2]
    oh = xq.shape[0] - 1
    ow = xq.shape[1] - 1
    a = jnp.maximum(xq * scale_ref[...] + shift_ref[...], 0.0) * mask_ref[...]
    acc = jnp.zeros((oh * ow, cout), jnp.float32)
    for kh in range(3):
        for kw in range(3):
            s = 2 * (kh % 2) + (kw % 2)                # parity slab of this tap
            tap = a[kh // 2:kh // 2 + oh, kw // 2:kw // 2 + ow,
                    s * cin:(s + 1) * cin].reshape(oh * ow, cin)
            acc = acc + _dot(tap, w1_ref[3 * kh + kw])
    y1_ref[0] = acc.astype(y1_ref.dtype)
    y1stat_ref[0, 0:1, :] = jnp.sum(acc, axis=0, keepdims=True)
    y1stat_ref[0, 1:2, :] = jnp.sum(acc * acc, axis=0, keepdims=True)


def _conv2_add_kernel(y1p_ref, mask_ref, scale_ref, shift_ref, w2_ref, b2_ref,
                      ysc_ref, sc_scale_ref, sc_shift_ref, o_ref):
    """Pass 3: conv2(relu(bn2(y1))) + b2 + PadBlock(bn_sc(shortcut)).

    y1p is y1 zero-padded by 1 in H/W; bn2 scale/shift is applied on the fly
    with the padding ring re-zeroed by the mask.  The shortcut BN is applied
    to the real Cin channels only and added into the first Cin output
    channels (PadBlock: remaining channels get conv2 output only).
    """
    y1p = y1p_ref[0]                                   # [H2+2, W2+2, Cout]
    oh = y1p.shape[0] - 2
    ow = y1p.shape[1] - 2
    cout = y1p.shape[2]
    cin = ysc_ref.shape[2]
    a = jnp.maximum(y1p * scale_ref[...] + shift_ref[...], 0.0) * mask_ref[...]
    acc = jnp.zeros((oh * ow, cout), jnp.float32)
    for kh in range(3):
        for kw in range(3):
            tap = a[kh:kh + oh, kw:kw + ow, :].reshape(oh * ow, cout)
            acc = acc + _dot(tap, w2_ref[3 * kh + kw])
    y2 = acc + b2_ref[...]                             # conv2 bias is live (no BN follows)
    s = ysc_ref[0] * sc_scale_ref[...] + sc_shift_ref[...]   # [H2*W2, Cin]
    o_ref[0, :, 0:cin] = (y2[:, 0:cin] + s).astype(o_ref.dtype)
    o_ref[0, :, cin:cout] = y2[:, cin:cout].astype(o_ref.dtype)


# ------------------------------ glue (JAX) --------------------------------

def _parity_fold(t):
    """[N, 2h, 2w, C] -> [N, h, w, 4*C]: (row,col) parity slabs folded into
    the channel axis, slab-major (ee, eo, oe, oo)."""
    return jnp.concatenate(
        [t[:, 0::2, 0::2, :], t[:, 0::2, 1::2, :],
         t[:, 1::2, 0::2, :], t[:, 1::2, 1::2, :]], axis=-1)


def _bn_affine(ssum, ssq, count, gamma, beta):
    """Finalize training-mode BN into per-channel scale/shift vectors."""
    mean = ssum / count
    var = jnp.maximum(ssq / count - mean * mean, 0.0)   # biased variance
    scale = gamma * lax.rsqrt(var + EPS)
    return scale[None, :], (beta - mean * scale)[None, :]


def init_params(key, cin, cout):
    ks = jax.random.split(key, 12)
    f32 = jnp.float32
    return dict(
        w1=0.1 * jax.random.normal(ks[0], (3, 3, cin, cout), f32),   # conv1 (HWIO)
        b1=0.1 * jax.random.normal(ks[1], (cout,), f32),             # dead under bn2
        w2=0.1 * jax.random.normal(ks[2], (3, 3, cout, cout), f32),  # conv2 (HWIO)
        b2=0.1 * jax.random.normal(ks[3], (cout,), f32),
        wsc=0.1 * jax.random.normal(ks[4], (cin, cin), f32),         # shortcut 1x1 conv
        bsc=0.1 * jax.random.normal(ks[5], (cin,), f32),             # dead under shortcut BN
        gamma1=1.0 + 0.1 * jax.random.normal(ks[6], (cin,), f32),    # bn1
        beta1=0.1 * jax.random.normal(ks[7], (cin,), f32),
        gamma2=1.0 + 0.1 * jax.random.normal(ks[8], (cout,), f32),   # bn2
        beta2=0.1 * jax.random.normal(ks[9], (cout,), f32),
        gsc=1.0 + 0.1 * jax.random.normal(ks[10], (cin,), f32),      # shortcut BN
        betasc=0.1 * jax.random.normal(ks[11], (cin,), f32),
    )


def forward_pallas(x_nchw, p):
    N, Cin, H, W = x_nchw.shape
    Cout = p["w1"].shape[-1]
    assert Cout == 2 * Cin and H % 2 == 0 and W % 2 == 0
    H2, W2 = H // 2, W // 2
    f32 = jnp.float32
    par = pltpu.CompilerParams(dimension_semantics=("parallel",))

    x = jnp.transpose(x_nchw, (0, 2, 3, 1))                   # NHWC (layout glue)

    # Zero-pad by 1 and parity-fold: [N, H2+1, W2+1, 4*Cin].  Every input
    # element appears exactly once (plus zeros), so this replaces the old
    # 9x-expanded im2col slab at ~1x the input size.
    xpar = _parity_fold(jnp.pad(x, ((0, 0), (1, 1), (1, 1), (0, 0))))
    # 1/0 mask of the real (non-padding) positions, shared by every image.
    mask1 = _parity_fold(jnp.pad(jnp.ones((1, H, W, Cin), f32),
                                 ((0, 0), (1, 1), (1, 1), (0, 0))))[0]

    xpar_spec = pl.BlockSpec((1, H2 + 1, W2 + 1, 4 * Cin),
                             lambda i: (i, 0, 0, 0))

    # ---- pass 1: bn1 stats + shortcut conv (+ its BN stats) ----
    ysc, xstat, scstat = pl.pallas_call(
        _stats_shortcut_kernel,
        grid=(N,),
        in_specs=[xpar_spec,
                  pl.BlockSpec((Cin, Cin), lambda i: (0, 0))],
        out_specs=(pl.BlockSpec((1, H2 * W2, Cin), lambda i: (i, 0, 0)),
                   pl.BlockSpec((1, 2, 4 * Cin), lambda i: (i, 0, 0)),
                   pl.BlockSpec((1, 2, Cin), lambda i: (i, 0, 0))),
        out_shape=(jax.ShapeDtypeStruct((N, H2 * W2, Cin), f32),
                   jax.ShapeDtypeStruct((N, 2, 4 * Cin), f32),
                   jax.ShapeDtypeStruct((N, 2, Cin), f32)),
        compiler_params=par,
    )(xpar, p["wsc"])

    # Finalize bn1 / shortcut-BN into per-channel scale & shift (tiny glue).
    scale1, shift1 = _bn_affine(
        jnp.sum(xstat[:, 0, :].reshape(N, 4, Cin), axis=(0, 1)),
        jnp.sum(xstat[:, 1, :].reshape(N, 4, Cin), axis=(0, 1)),
        N * H * W, p["gamma1"], p["beta1"])
    scale_sc, shift_sc = _bn_affine(
        jnp.sum(scstat[:, 0, :], axis=0), jnp.sum(scstat[:, 1, :], axis=0),
        N * H2 * W2, p["gsc"], p["betasc"])

    # ---- pass 2: conv1 fused with bn1-apply/ReLU; emits bn2 stats ----
    y1, y1stat = pl.pallas_call(
        _conv1_kernel,
        grid=(N,),
        in_specs=[xpar_spec,
                  pl.BlockSpec((H2 + 1, W2 + 1, 4 * Cin), lambda i: (0, 0, 0)),
                  pl.BlockSpec((1, 4 * Cin), lambda i: (0, 0)),
                  pl.BlockSpec((1, 4 * Cin), lambda i: (0, 0)),
                  pl.BlockSpec((9, Cin, Cout), lambda i: (0, 0, 0))],
        out_specs=(pl.BlockSpec((1, H2 * W2, Cout), lambda i: (i, 0, 0)),
                   pl.BlockSpec((1, 2, Cout), lambda i: (i, 0, 0))),
        out_shape=(jax.ShapeDtypeStruct((N, H2 * W2, Cout), f32),
                   jax.ShapeDtypeStruct((N, 2, Cout), f32)),
        compiler_params=par,
    )(xpar, mask1, jnp.tile(scale1, (1, 4)), jnp.tile(shift1, (1, 4)),
      p["w1"].reshape(9, Cin, Cout))

    scale2, shift2 = _bn_affine(
        jnp.sum(y1stat[:, 0, :], axis=0), jnp.sum(y1stat[:, 1, :], axis=0),
        N * H2 * W2, p["gamma2"], p["beta2"])

    # ---- pass 3: conv2 fused with bn2-apply/ReLU + shortcut BN + residual ----
    y1p = jnp.pad(y1.reshape(N, H2, W2, Cout), ((0, 0), (1, 1), (1, 1), (0, 0)))
    mask2 = jnp.pad(jnp.ones((H2, W2, Cout), f32), ((1, 1), (1, 1), (0, 0)))
    out2d = pl.pallas_call(
        _conv2_add_kernel,
        grid=(N,),
        in_specs=[pl.BlockSpec((1, H2 + 2, W2 + 2, Cout), lambda i: (i, 0, 0, 0)),
                  pl.BlockSpec((H2 + 2, W2 + 2, Cout), lambda i: (0, 0, 0)),
                  pl.BlockSpec((1, Cout), lambda i: (0, 0)),
                  pl.BlockSpec((1, Cout), lambda i: (0, 0)),
                  pl.BlockSpec((9, Cout, Cout), lambda i: (0, 0, 0)),
                  pl.BlockSpec((1, Cout), lambda i: (0, 0)),
                  pl.BlockSpec((1, H2 * W2, Cin), lambda i: (i, 0, 0)),
                  pl.BlockSpec((1, Cin), lambda i: (0, 0)),
                  pl.BlockSpec((1, Cin), lambda i: (0, 0))],
        out_specs=pl.BlockSpec((1, H2 * W2, Cout), lambda i: (i, 0, 0)),
        out_shape=jax.ShapeDtypeStruct((N, H2 * W2, Cout), f32),
        compiler_params=par,
    )(y1p, mask2, scale2, shift2, p["w2"].reshape(9, Cout, Cout),
      p["b2"][None, :], ysc, scale_sc, shift_sc)

    out = out2d.reshape(N, H2, W2, Cout)
    return jnp.transpose(out, (0, 3, 1, 2))                   # back to NCHW


# -------------------------- pure-JAX reference -----------------------------

def _bn_train_ref(z, g, b):
    mean = jnp.mean(z, axis=(0, 1, 2), keepdims=True)
    var = jnp.mean((z - mean) ** 2, axis=(0, 1, 2), keepdims=True)
    return (z - mean) * lax.rsqrt(var + EPS) * g + b


def forward_ref(x_nchw, p):
    x = jnp.transpose(x_nchw, (0, 2, 3, 1))
    dn3 = ("NHWC", "HWIO", "NHWC")
    a1 = jnp.maximum(_bn_train_ref(x, p["gamma1"], p["beta1"]), 0.0)
    y1 = lax.conv_general_dilated(a1, p["w1"], (2, 2), ((1, 1), (1, 1)),
                                  dimension_numbers=dn3) + p["b1"]
    a2 = jnp.maximum(_bn_train_ref(y1, p["gamma2"], p["beta2"]), 0.0)
    y2 = lax.conv_general_dilated(a2, p["w2"], (1, 1), ((1, 1), (1, 1)),
                                  dimension_numbers=dn3) + p["b2"]
    wsc4 = p["wsc"][None, None]                                # [1,1,Cin,Cin]
    s = lax.conv_general_dilated(x, wsc4, (2, 2), "VALID",
                                 dimension_numbers=dn3) + p["bsc"]
    s = _bn_train_ref(s, p["gsc"], p["betasc"])
    s = jnp.concatenate([s, jnp.zeros_like(s)], axis=-1)       # PadBlock
    return jnp.transpose(y2 + s, (0, 3, 1, 2))                 # act3 = Identity


# --------------------------------- main ------------------------------------

if __name__ == "__main__":
    key = jax.random.PRNGKey(0)
    kx, kp = jax.random.split(key)
    N, Cin, H, W = 2, 4, 16, 16
    Cout = 2 * Cin      # required by the PadBlock shortcut for the residual add
    x = jax.random.normal(kx, (N, Cin, H, W), jnp.float32)
    params = init_params(kp, Cin, Cout)

    out = jax.block_until_ready(forward_pallas(x, params))
    ref = forward_ref(x, params)
    assert out.shape == (N, Cout, H // 2, W // 2), out.shape
    err = float(jnp.abs(out - ref).max())
    assert jnp.allclose(out, ref, atol=1e-3, rtol=1e-3), err
    print("KERNEL_OK")
</pallas_src>

<mosaic_0001>
module attributes {stable_mosaic.version = 11 : i64} {
  func.func @_stats_shortcut_kernel(%arg0: i32, %arg1: memref<1x9x9x16xf32, #tpu.memory_space<vmem>>, %arg2: memref<4x4xf32, #tpu.memory_space<vmem>>, %arg3: memref<1x64x4xf32, #tpu.memory_space<vmem>>, %arg4: memref<1x2x16xf32, #tpu.memory_space<vmem>>, %arg5: memref<1x2x4xf32, #tpu.memory_space<vmem>>) attributes {dimension_semantics = [#tpu.dimension_semantics<parallel>], iteration_bounds = array<i64: 2>, scalar_prefetch = 0 : i64, scratch_operands = 0 : i64, tpu.core_type = #tpu.core_type<tc>, window_params = [{transform_indices = @transform_0, window_bounds = array<i64: 1, 9, 9, 16>}, {pipeline_mode = #tpu.pipeline_mode<synchronous>, transform_indices = @transform_1, window_bounds = array<i64: 4, 4>}, {transform_indices = @transform_2, window_bounds = array<i64: 1, 64, 4>}, {transform_indices = @transform_3, window_bounds = array<i64: 1, 2, 16>}, {transform_indices = @transform_4, window_bounds = array<i64: 1, 2, 4>}]} {
    %c0 = arith.constant 0 : index
    %c0_0 = arith.constant 0 : index
    %c0_1 = arith.constant 0 : index
    %c0_2 = arith.constant 0 : index
    %0 = vector.load %arg1[%c0, %c0_0, %c0_1, %c0_2] : memref<1x9x9x16xf32, #tpu.memory_space<vmem>>, vector<1x9x9x16xf32>
    %1 = vector.shape_cast %0 : vector<1x9x9x16xf32> to vector<9x9x16xf32>
    %cst = arith.constant dense<0.000000e+00> : vector<9x16xf32>
    %2 = vector.multi_reduction <add>, %1, %cst [0] : vector<9x9x16xf32> to vector<9x16xf32>
    %cst_3 = arith.constant dense<0.000000e+00> : vector<16xf32>
    %3 = vector.multi_reduction <add>, %2, %cst_3 [0] : vector<9x16xf32> to vector<16xf32>
    %4 = vector.shape_cast %3 : vector<16xf32> to vector<1x16xf32>
    %c0_4 = arith.constant 0 : index
    %c0_5 = arith.constant 0 : index
    %c0_6 = arith.constant 0 : index
    %5 = vector.load %arg4[%c0_4, %c0_5, %c0_6] : memref<1x2x16xf32, #tpu.memory_space<vmem>>, vector<1x1x16xf32>
    %6 = vector.shape_cast %5 : vector<1x1x16xf32> to vector<1x16xf32>
    %7 = vector.shape_cast %4 : vector<1x16xf32> to vector<1x1x16xf32>
    tpu.vector_store %arg4[%c0_4, %c0_5, %c0_6], %7 {strides = array<i32>} : memref<1x2x16xf32, #tpu.memory_space<vmem>>, vector<1x1x16xf32>,
    %8 = arith.mulf %1, %1 : vector<9x9x16xf32>
    %cst_7 = arith.constant dense<0.000000e+00> : vector<9x16xf32>
    %9 = vector.multi_reduction <add>, %8, %cst_7 [0] : vector<9x9x16xf32> to vector<9x16xf32>
    %cst_8 = arith.constant dense<0.000000e+00> : vector<16xf32>
    %10 = vector.multi_reduction <add>, %9, %cst_8 [0] : vector<9x16xf32> to vector<16xf32>
    %11 = vector.shape_cast %10 : vector<16xf32> to vector<1x16xf32>
    %c0_9 = arith.constant 0 : index
    %c1 = arith.constant 1 : index
    %c0_10 = arith.constant 0 : index
    %12 = vector.load %arg4[%c0_9, %c1, %c0_10] : memref<1x2x16xf32, #tpu.memory_space<vmem>>, vector<1x1x16xf32>
    %13 = vector.shape_cast %12 : vector<1x1x16xf32> to vector<1x16xf32>
    %14 = vector.shape_cast %11 : vector<1x16xf32> to vector<1x1x16xf32>
    tpu.vector_store %arg4[%c0_9, %c1, %c0_10], %14 {strides = array<i32>} : memref<1x2x16xf32, #tpu.memory_space<vmem>>, vector<1x1x16xf32>,
    %15 = vector.extract_strided_slice %1 {offsets = [0, 0, 12], sizes = [8, 8, 4], strides = [1, 1, 1]} : vector<9x9x16xf32> to vector<8x8x4xf32>
    %16 = vector.shape_cast %15 : vector<8x8x4xf32> to vector<64x4xf32>
    %c0_11 = arith.constant 0 : index
    %c0_12 = arith.constant 0 : index
    %17 = vector.load %arg2[%c0_11, %c0_12] : memref<4x4xf32, #tpu.memory_space<vmem>>, vector<4x4xf32>
    %cst_13 = arith.constant dense<0.000000e+00> : vector<64x4xf32>
    %18 = tpu.matmul %16, %17, %cst_13 {dimension_numbers = #tpu.dot_dimension_numbers<[1], [0], [0], [1], [0, 0, 1, 1], [], []>} : vector<64x4xf32>, vector<4x4xf32>, vector<64x4xf32> -> vector<64x4xf32>
    %c0_14 = arith.constant 0 : index
    %c0_15 = arith.constant 0 : index
    %c0_16 = arith.constant 0 : index
    %19 = vector.load %arg3[%c0_14, %c0_15, %c0_16] : memref<1x64x4xf32, #tpu.memory_space<vmem>>, vector<1x64x4xf32>
    %20 = vector.shape_cast %19 : vector<1x64x4xf32> to vector<64x4xf32>
    %21 = vector.shape_cast %18 : vector<64x4xf32> to vector<1x64x4xf32>
    tpu.vector_store %arg3[%c0_14, %c0_15, %c0_16], %21 {strides = array<i32>} : memref<1x64x4xf32, #tpu.memory_space<vmem>>, vector<1x64x4xf32>,
    %cst_17 = arith.constant dense<0.000000e+00> : vector<4xf32>
    %22 = vector.multi_reduction <add>, %18, %cst_17 [0] : vector<64x4xf32> to vector<4xf32>
    %23 = vector.shape_cast %22 : vector<4xf32> to vector<1x4xf32>
    %c0_18 = arith.constant 0 : index
    %c0_19 = arith.constant 0 : index
    %c0_20 = arith.constant 0 : index
    %24 = vector.load %arg5[%c0_18, %c0_19, %c0_20] : memref<1x2x4xf32, #tpu.memory_space<vmem>>, vector<1x1x4xf32>
    %25 = vector.shape_cast %24 : vector<1x1x4xf32> to vector<1x4xf32>
    %26 = vector.shape_cast %23 : vector<1x4xf32> to vector<1x1x4xf32>
    tpu.vector_store %arg5[%c0_18, %c0_19, %c0_20], %26 {strides = array<i32>} : memref<1x2x4xf32, #tpu.memory_space<vmem>>, vector<1x1x4xf32>,
    %27 = arith.mulf %18, %18 : vector<64x4xf32>
    %cst_21 = arith.constant dense<0.000000e+00> : vector<4xf32>
    %28 = vector.multi_reduction <add>, %27, %cst_21 [0] : vector<64x4xf32> to vector<4xf32>
    %29 = vector.shape_cast %28 : vector<4xf32> to vector<1x4xf32>
    %c0_22 = arith.constant 0 : index
    %c1_23 = arith.constant 1 : index
    %c0_24 = arith.constant 0 : index
    %30 = vector.load %arg5[%c0_22, %c1_23, %c0_24] : memref<1x2x4xf32, #tpu.memory_space<vmem>>, vector<1x1x4xf32>
    %31 = vector.shape_cast %30 : vector<1x1x4xf32> to vector<1x4xf32>
    %32 = vector.shape_cast %29 : vector<1x4xf32> to vector<1x1x4xf32>
    tpu.vector_store %arg5[%c0_22, %c1_23, %c0_24], %32 {strides = array<i32>} : memref<1x2x4xf32, #tpu.memory_space<vmem>>, vector<1x1x4xf32>,
    return
  }
  func.func @transform_0(%arg0: i32) -> (i32, i32, i32, i32) {
    %c0_i32 = arith.constant 0 : i32
    %c0_i32_0 = arith.constant 0 : i32
    %c0_i32_1 = arith.constant 0 : i32
    %c0_i32_2 = arith.constant 0 : i32
    return %arg0, %c0_i32, %c0_i32_0, %c0_i32_1 : i32, i32, i32, i32
  }
  func.func @transform_1(%arg0: i32) -> (i32, i32) {
    %c0_i32 = arith.constant 0 : i32
    %c0_i32_0 = arith.constant 0 : i32
    %c0_i32_1 = arith.constant 0 : i32
    return %c0_i32, %c0_i32_0 : i32, i32
  }
  func.func @transform_2(%arg0: i32) -> (i32, i32, i32) {
    %c0_i32 = arith.constant 0 : i32
    %c0_i32_0 = arith.constant 0 : i32
    %c0_i32_1 = arith.constant 0 : i32
    return %arg0, %c0_i32, %c0_i32_0 : i32, i32, i32
  }
  func.func @transform_3(%arg0: i32) -> (i32, i32, i32) {
    %c0_i32 = arith.constant 0 : i32
    %c0_i32_0 = arith.constant 0 : i32
    %c0_i32_1 = arith.constant 0 : i32
    return %arg0, %c0_i32, %c0_i32_0 : i32, i32, i32
  }
  func.func @transform_4(%arg0: i32) -> (i32, i32, i32) {
    %c0_i32 = arith.constant 0 : i32
    %c0_i32_0 = arith.constant 0 : i32
    %c0_i32_1 = arith.constant 0 : i32
    return %arg0, %c0_i32, %c0_i32_0 : i32, i32, i32
  }
}

</mosaic_0001>

<llo_original>
// kernel: tpu_custom_call.1
$region0: #{tpu_custom_call.1}
  #allocation0 [shape = 'u32[]', space=smem, size = 0x4, offset = 0x4, fixed_abs, tag = 'smem constant byte address 0x4 - core index']
  #allocation1 [shape = 'u32[144,128]{1,0:T(1,128)}', space=vmem, size = 0x12000, scoped, tag = 'internal scratch']
  %s0 = inlined_call_operand.vmem [shape: f32[2,9,9,16], index: 0, kind: input, shape index: {}]
  %s1 = inlined_call_operand.vmem [shape: f32[4,4], index: 1, kind: input, shape index: {}]
  %s2 = inlined_call_operand.vmem [shape: f32[2,64,4], index: 2, kind: output, shape index: {0}]
  %s3 = inlined_call_operand.hbm [shape: f32[2,2,16], index: 3, kind: output, shape index: {1}]
  %s4 = inlined_call_operand.hbm [shape: f32[2,2,4], index: 4, kind: output, shape index: {2}]
  %5 = xla_tuple %s2, %s3, %s4
  %s6 = sld [smem:[#allocation0]]
  $region57: #{tpu_custom_call.1} parent=0
    _
  %s8 = ssub.s32 1, %s6
  %s9 = scalar_select 0, %s8, %s6
  $region1: #{tpu_custom_call.1} parent=0
    #allocation2 [shape = 'u8[2048]{0}', space=vmem, size = 0x800, scoped, tag = 'output window, operand 1']
    #allocation3 [shape = 's32[2]{0}', space=sflag, size = 0x8, scoped, tag = 'scoped memory for tpu_custom_call.1']
    #allocation4 [shape = 'u8[2048]{0}', space=vmem, size = 0x800, scoped, tag = 'output window, operand 2']
    #allocation5 [shape = 's32[2]{0}', space=sflag, size = 0x8, scoped, tag = 'scoped memory for tpu_custom_call.1']
    %10 = vsyncpa [#allocation3], 0
    %s11 = scalar_lea.sflag [#allocation3], 1
    %12 = vsyncpa %s11, 0
    %13 = vsyncpa [#allocation5], 0
    %s14 = scalar_lea.sflag [#allocation5], 1
    %15 = vsyncpa %s14, 0
    loop: start=0, step=1, limit=4
    $region2: #{tpu_custom_call.1} parent=1 // loop_pre_header
      _
    $region3: #{tpu_custom_call.1} parent=1 // loop_header
      %s17 = sphi 0, %s21
      %p18 = scmp.ge.s32.totalorder %s17, 4
      %s27 = sphi 0, %s29
      %s30 = sphi 0, %s27
      %s31 = sphi 0, %s30
      %s47 = sphi 0, %s31
      %s51 = sphi 0, %s51
      %s53 = sphi 0, %s51
      %s54 = sphi 0, %s53
      %s68 = sphi 0, %s54
      %s74 = sphi 0, %s76
      %s77 = sphi 0, %s74
      %s78 = sphi 0, %s77
      %s94 = sphi 0, %s78
      %s100 = sphi 0, %s102
      %s103 = sphi 0, %s100
      %s104 = sphi 0, %s103
      %s120 = sphi 0, %s104
      %s126 = sphi 0, %s128
      %s129 = sphi 0, %s126
      %s130 = sphi 0, %s129
      %s146 = sphi 0, %s130
    $region4: #{tpu_custom_call.1} parent=1 // loop_header_branch
      %20 = sbr.rel (%p18) target = $region8
    $region5: #{tpu_custom_call.1} parent=1 // loop_body
      %s22 = ssub.s32 %s17, 1
      %s23 = ssub.s32 %s17, 2
      %s24 = sadd.s32 %s17, 1
      %s25 = ssub.s32 %s17, %s24
      %p26 = scmp.eq.s32.totalorder %s25, 0
      %s28 = sadd.s32 %s27, 1
      %s29 = scalar_select %p26, %s27, %s28
      %p32 = pneg %p26
      %p33 = scmp.eq.s32.totalorder %s17, 1
      %p34 = por %p32, %p33
      %p35 = scmp.ne.s32.totalorder %s27, %s30
      %p36 = scmp.eq.s32.totalorder %s17, 0
      %p37 = por %p35, %p36
      %p38 = scmp.ne.s32.totalorder %s27, %s30
      %p39 = scmp.eq.s32.totalorder %s22, 1
      %p40 = por %p38, %p39
      %p41 = scmp.ne.s32.totalorder %s30, %s31
      %p42 = scmp.eq.s32.totalorder %s22, 0
      %p43 = por %p41, %p42
      %p44 = scmp.ne.s32.totalorder %s30, %s31
      %p45 = scmp.eq.s32.totalorder %s23, 1
      %p46 = por %p44, %p45
      %p48 = scmp.ne.s32.totalorder %s31, %s47
      %p49 = scmp.eq.s32.totalorder %s23, 0
      %p50 = por %p48, %p49
      %s52 = sadd.s32 %s51, 1
      %p55 = scmp.eq.s32.totalorder %s17, 1
      %p56 = scmp.ne.s32.totalorder %s51, %s53
      %p57 = scmp.eq.s32.totalorder %s17, 0
      %p58 = por %p56, %p57
      %p59 = scmp.ne.s32.totalorder %s51, %s53
      %p60 = scmp.eq.s32.totalorder %s22, 1
      %p61 = por %p59, %p60
      %p62 = scmp.ne.s32.totalorder %s53, %s54
      %p63 = scmp.eq.s32.totalorder %s22, 0
      %p64 = por %p62, %p63
      %p65 = scmp.ne.s32.totalorder %s53, %s54
      %p66 = scmp.eq.s32.totalorder %s23, 1
      %p67 = por %p65, %p66
      %p69 = scmp.ne.s32.totalorder %s54, %s68
      %p70 = scmp.eq.s32.totalorder %s23, 0
      %p71 = por %p69, %p70
      %s72 = ssub.s32 %s17, %s24
      %p73 = scmp.eq.s32.totalorder %s72, 0
      %s75 = sadd.s32 %s74, 1
      %s76 = scalar_select %p73, %s74, %s75
      %p79 = pneg %p73
      %p80 = scmp.eq.s32.totalorder %s17, 1
      %p81 = por %p79, %p80
      %p82 = scmp.ne.s32.totalorder %s74, %s77
      %p83 = scmp.eq.s32.totalorder %s17, 0
      %p84 = por %p82, %p83
      %p85 = scmp.ne.s32.totalorder %s74, %s77
      %p86 = scmp.eq.s32.totalorder %s22, 1
      %p87 = por %p85, %p86
      %p88 = scmp.ne.s32.totalorder %s77, %s78
      %p89 = scmp.eq.s32.totalorder %s22, 0
      %p90 = por %p88, %p89
      %p91 = scmp.ne.s32.totalorder %s77, %s78
      %p92 = scmp.eq.s32.totalorder %s23, 1
      %p93 = por %p91, %p92
      %p95 = scmp.ne.s32.totalorder %s78, %s94
      %p96 = scmp.eq.s32.totalorder %s23, 0
      %p97 = por %p95, %p96
      %s98 = ssub.s32 %s17, %s24
      %p99 = scmp.eq.s32.totalorder %s98, 0
      %s101 = sadd.s32 %s100, 1
      %s102 = scalar_select %p99, %s100, %s101
      %p105 = pneg %p99
      %p106 = scmp.eq.s32.totalorder %s17, 1
      %p107 = por %p105, %p106
      %p108 = scmp.ne.s32.totalorder %s100, %s103
      %p109 = scmp.eq.s32.totalorder %s17, 0
      %p110 = por %p108, %p109
      %p111 = scmp.ne.s32.totalorder %s100, %s103
      %p112 = scmp.eq.s32.totalorder %s22, 1
      %p113 = por %p111, %p112
      %p114 = scmp.ne.s32.totalorder %s103, %s104
      %p115 = scmp.eq.s32.totalorder %s22, 0
      %p116 = por %p114, %p115
      %p117 = scmp.ne.s32.totalorder %s103, %s104
      %p118 = scmp.eq.s32.totalorder %s23, 1
      %p119 = por %p117, %p118
      %p121 = scmp.ne.s32.totalorder %s104, %s120
      %p122 = scmp.eq.s32.totalorder %s23, 0
      %p123 = por %p121, %p122
      %s124 = ssub.s32 %s17, %s24
      %p125 = scmp.eq.s32.totalorder %s124, 0
      %s127 = sadd.s32 %s126, 1
      %s128 = scalar_select %p125, %s126, %s127
      %p131 = pneg %p125
      %p132 = scmp.eq.s32.totalorder %s17, 1
      %p133 = por %p131, %p132
      %p134 = scmp.ne.s32.totalorder %s126, %s129
      %p135 = scmp.eq.s32.totalorder %s17, 0
      %p136 = por %p134, %p135
      %p137 = scmp.ne.s32.totalorder %s126, %s129
      %p138 = scmp.eq.s32.totalorder %s22, 1
      %p139 = por %p137, %p138
      %p140 = scmp.ne.s32.totalorder %s129, %s130
      %p141 = scmp.eq.s32.totalorder %s22, 0
      %p142 = por %p140, %p141
      %p143 = scmp.ne.s32.totalorder %s129, %s130
      %p144 = scmp.eq.s32.totalorder %s23, 1
      %p145 = por %p143, %p144
      %p147 = scmp.ne.s32.totalorder %s130, %s146
      %p148 = scmp.eq.s32.totalorder %s23, 0
      %p149 = por %p147, %p148
      %p150 = scmp.le.s32.totalorder 1, %s17
      %p151 = scmp.lt.s32.totalorder %s17, 3
      %p152 = pnand %p150, %p151
      %p153 = pneg %p152
      // Predicated region
      $region9: #{tpu_custom_call.1} parent=5 // pred_check
        _
      $region10: #{tpu_custom_call.1} parent=5 // pred_check_branch
        %155 = sbr.rel (%p152) target = $region12
      $region11: #{tpu_custom_call.1} parent=5 // pred_region
        %s156 = ssub.s32 %s17, 1
        // Predicated region
        $region13: #{tpu_custom_call.1} parent=11 // pred_check
          %p157 = pneg %p64
        $region14: #{tpu_custom_call.1} parent=11 // pred_check_branch
          %159 = sbr.rel (%p157) target = $region16
        $region15: #{tpu_custom_call.1} parent=11 // pred_region
          _
        $region16: #{tpu_custom_call.1} parent=11 // pred_fallthru
          _
      $region12: #{tpu_custom_call.1} parent=5 // pred_fallthru
        _
      %p160 = scmp.lt.s32.totalorder %s17, 2
      // Predicated region
      $region17: #{tpu_custom_call.1} parent=5 // pred_check
        %p161 = pneg %p160
      $region18: #{tpu_custom_call.1} parent=5 // pred_check_branch
        %163 = sbr.rel (%p161) target = $region20
      $region19: #{tpu_custom_call.1} parent=5 // pred_region
        // Predicated region
        $region21: #{tpu_custom_call.1} parent=19 // pred_check
          %p164 = pneg %p37
        $region22: #{tpu_custom_call.1} parent=19 // pred_check_branch
          %166 = sbr.rel (%p164) target = $region24
        $region23: #{tpu_custom_call.1} parent=19 // pred_region
          %p167 = scmp.lt.s32.totalorder %s17, 1
          %s168 = scalar_select %p167, %s17, 1
          %s169 = smul.addr %s168, 18
          %s170 = smul.addr %s169, 8
          %s171 = scalar_lea.vmem %s0, %s170
        $region24: #{tpu_custom_call.1} parent=19 // pred_fallthru
          _
      $region20: #{tpu_custom_call.1} parent=5 // pred_fallthru
        _
      %p172 = scmp.le.s32.totalorder 1, %s17
      %p173 = scmp.lt.s32.totalorder %s17, 3
      %p174 = pnand %p172, %p173
      %p175 = pneg %p174
      // Predicated region
      $region25: #{tpu_custom_call.1} parent=5 // pred_check
        _
      $region26: #{tpu_custom_call.1} parent=5 // pred_check_branch
        %177 = sbr.rel (%p174) target = $region28
      $region27: #{tpu_custom_call.1} parent=5 // pred_region
        %s178 = ssub.s32 %s17, 1
        %p179 = scmp.lt.s32.totalorder %s22, 1
        %s180 = scalar_select %p179, %s22, 1
        %s181 = smul.addr %s180, 18
        %s182 = smul.addr %s181, 8
        %s183 = scalar_lea.vmem %s0, %s182
        %p184 = pneg %p43
        %p185 = pneg %p40
        %p186 = pneg %p64
        %p187 = pneg %p61
        %p188 = pneg %p90
        %p189 = pneg %p87
        %p190 = scmp.lt.s32.totalorder %s22, 1
        %s191 = scalar_select %p190, %s22, 1
        %s192 = smul.addr %s191, 8
        %s193 = smul.addr %s192, 8
        %s194 = scalar_lea.vmem %s2, %s193
        %p195 = pneg %p116
        %p196 = pneg %p113
        %s197 = sand.u32 %s103, 1
        %s198 = scalar_lea.sflag [#allocation3], %s197
        %s199 = sand.u32 %s103, 1
        %s200 = smul.addr %s199, 2
        %s201 = scalar_lea.vmem [#allocation2], %s200
        %p202 = pneg %p142
        %p203 = pneg %p139
        %s204 = sand.u32 %s129, 1
        %s205 = scalar_lea.sflag [#allocation5], %s204
        %s206 = sand.u32 %s129, 1
        %s207 = smul.addr %s206, 2
        %s208 = scalar_lea.vmem [#allocation4], %s207
        %p209 = scmp.lt.s32.totalorder %s22, 1
        %s210 = scalar_select %p209, %s22, 1
        %s211 = smul.addr %s210, 18
        %s212 = smul.addr %s211, 8
        %s213 = scalar_lea.vmem %s0, %s212
        %p214 = scmp.lt.s32.totalorder %s22, 1
        %s215 = scalar_select %p214, %s22, 1
        %s216 = smul.addr %s215, 8
        %s217 = smul.addr %s216, 8
        %s218 = scalar_lea.vmem %s2, %s217
        %v219 = vld [vmem:[%s213] sm:$0xff]
        %v220 = vld [vmem:[%s213 + $0x8] sm:$0x1]
        %v221 = vld [vmem:[%s213 + $0x10] sm:$0xff]
        %v222 = vld [vmem:[%s213 + $0x18] sm:$0x1]
        %v223 = vld [vmem:[%s213 + $0x20] sm:$0xff]
        %v224 = vld [vmem:[%s213 + $0x28] sm:$0x1]
        %v225 = vld [vmem:[%s213 + $0x30] sm:$0xff]
        %v226 = vld [vmem:[%s213 + $0x38] sm:$0x1]
        %v227 = vld [vmem:[%s213 + $0x40] sm:$0xff]
        %v228 = vld [vmem:[%s213 + $0x48] sm:$0x1]
        %v229 = vld [vmem:[%s213 + $0x50] sm:$0xff]
        %v230 = vld [vmem:[%s213 + $0x58] sm:$0x1]
        %v231 = vld [vmem:[%s213 + $0x60] sm:$0xff]
        %v232 = vld [vmem:[%s213 + $0x68] sm:$0x1]
        %v233 = vld [vmem:[%s213 + $0x70] sm:$0xff]
        %v234 = vld [vmem:[%s213 + $0x78] sm:$0x1]
        %v235 = vld [vmem:[%s213 + $0x80] sm:$0xff]
        %v236 = vld [vmem:[%s213 + $0x88] sm:$0x1]
        %vm237 = vcmask 130048
        %v238 = vsel %vm237, %v219, 0.0
        %v239 = vsel %vm237, %v221, 0.0
        %v240 = vadd.f32 %v238, %v239
        %v241 = vsel %vm237, %v223, 0.0
        %v242 = vadd.f32 %v240, %v241
        %v243 = vsel %vm237, %v225, 0.0
        %v244 = vadd.f32 %v242, %v243
        %v245 = vsel %vm237, %v227, 0.0
        %v246 = vadd.f32 %v244, %v245
        %v247 = vsel %vm237, %v229, 0.0
        %v248 = vadd.f32 %v246, %v247
        %v249 = vsel %vm237, %v231, 0.0
        %v250 = vadd.f32 %v248, %v249
        %v251 = vsel %vm237, %v233, 0.0
        %v252 = vadd.f32 %v250, %v251
        %v253 = vsel %vm237, %v235, 0.0
        %v254 = vadd.f32 %v252, %v253
        %vm255 = vcmask 122880
        %v256 = vsel %vm255, %v220, 0.0
        %v257 = vsel %vm255, %v222, 0.0
        %v258 = vadd.f32 %v256, %v257
        %v259 = vsel %vm255, %v224, 0.0
        %v260 = vadd.f32 %v258, %v259
        %v261 = vsel %vm255, %v226, 0.0
        %v262 = vadd.f32 %v260, %v261
        %v263 = vsel %vm255, %v228, 0.0
        %v264 = vadd.f32 %v262, %v263
        %v265 = vsel %vm255, %v230, 0.0
        %v266 = vadd.f32 %v264, %v265
        %v267 = vsel %vm255, %v232, 0.0
        %v268 = vadd.f32 %v266, %v267
        %v269 = vsel %vm255, %v234, 0.0
        %v270 = vadd.f32 %v268, %v269
        %v271 = vsel %vm255, %v236, 0.0
        %v272 = vadd.f32 %v270, %v271
        %v273 = vsel %vm237, %v254, 0.0
        %v274 = vsel %vm255, %v272, 0.0
        %v275 = vadd.f32 %v273, %v274
        %v276 = vrot.slane %v275, 4
        %v277 = vadd.f32 %v275, %v276
        %v278 = vrot.slane %v277, 2
        %v279 = vadd.f32 %v277, %v278
        %v280 = vrot.slane %v279, 1
        %v281 = vadd.f32 %v279, %v280
        %282 = vst.msk [vmem:[%s201] sm:$0x1] %vm255, %v281
        %v283 = vmul.f32 %v219, %v219
        %v284 = vmul.f32 %v220, %v220
        %v285 = vmul.f32 %v221, %v221
        %v286 = vmul.f32 %v222, %v222
        %v287 = vmul.f32 %v223, %v223
        %v288 = vmul.f32 %v224, %v224
        %v289 = vmul.f32 %v225, %v225
        %v290 = vmul.f32 %v226, %v226
        %v291 = vmul.f32 %v227, %v227
        %v292 = vmul.f32 %v228, %v228
        %v293 = vmul.f32 %v229, %v229
        %v294 = vmul.f32 %v230, %v230
        %v295 = vmul.f32 %v231, %v231
        %v296 = vmul.f32 %v232, %v232
        %v297 = vmul.f32 %v233, %v233
        %v298 = vmul.f32 %v234, %v234
        %v299 = vmul.f32 %v235, %v235
        %v300 = vmul.f32 %v236, %v236
        %v301 = vsel %vm237, %v283, 0.0
        %v302 = vsel %vm237, %v285, 0.0
        %v303 = vadd.f32 %v301, %v302
        %v304 = vsel %vm237, %v287, 0.0
        %v305 = vadd.f32 %v303, %v304
        %v306 = vsel %vm237, %v289, 0.0
        %v307 = vadd.f32 %v305, %v306
        %v308 = vsel %vm237, %v291, 0.0
        %v309 = vadd.f32 %v307, %v308
        %v310 = vsel %vm237, %v293, 0.0
        %v311 = vadd.f32 %v309, %v310
        %v312 = vsel %vm237, %v295, 0.0
        %v313 = vadd.f32 %v311, %v312
        %v314 = vsel %vm237, %v297, 0.0
        %v315 = vadd.f32 %v313, %v314
        %v316 = vsel %vm237, %v299, 0.0
        %v317 = vadd.f32 %v315, %v316
        %v318 = vsel %vm255, %v284, 0.0
        %v319 = vsel %vm255, %v286, 0.0
        %v320 = vadd.f32 %v318, %v319
        %v321 = vsel %vm255, %v288, 0.0
        %v322 = vadd.f32 %v320, %v321
        %v323 = vsel %vm255, %v290, 0.0
        %v324 = vadd.f32 %v322, %v323
        %v325 = vsel %vm255, %v292, 0.0
        %v326 = vadd.f32 %v324, %v325
        %v327 = vsel %vm255, %v294, 0.0
        %v328 = vadd.f32 %v326, %v327
        %v329 = vsel %vm255, %v296, 0.0
        %v330 = vadd.f32 %v328, %v329
        %v331 = vsel %vm255, %v298, 0.0
        %v332 = vadd.f32 %v330, %v331
        %v333 = vsel %vm255, %v300, 0.0
        %v334 = vadd.f32 %v332, %v333
        %v335 = vsel %vm237, %v317, 0.0
        %v336 = vsel %vm255, %v334, 0.0
        %v337 = vadd.f32 %v335, %v336
        %v338 = vrot.slane %v337, 4
        %v339 = vadd.f32 %v337, %v338
        %v340 = vrot.slane %v339, 2
        %v341 = vadd.f32 %v339, %v340
        %v342 = vrot.slane %v341, 1
        %v343 = vadd.f32 %v341, %v342
        %344 = vst.msk [vmem:[%s201 + $0x1] sm:$0x1] %vm255, %v343
        %v345 = vld [vmem:[%s1] sm:$0xf]
        %354 = vrot.lane.b32.xlu0 %v219, 116
        %v355 = vpop.permute.xlu0 %354
        %356 = vrot.lane.b32.xlu0 %v221, 116
        %v357 = vpop.permute.xlu0 %356
        %358 = vrot.lane.b32.xlu0 %v223, 116
        %v359 = vpop.permute.xlu0 %358
        %360 = vrot.lane.b32.xlu0 %v225, 116
        %v361 = vpop.permute.xlu0 %360
        %362 = vrot.lane.b32.xlu0 %v227, 116
        %v363 = vpop.permute.xlu0 %362
        %364 = vrot.lane.b32.xlu0 %v229, 116
        %v365 = vpop.permute.xlu0 %364
        %366 = vrot.lane.b32.xlu0 %v231, 116
        %v367 = vpop.permute.xlu0 %366
        %368 = vrot.lane.b32.xlu0 %v233, 116
        %v369 = vpop.permute.xlu0 %368
        %vm370 = vcmask 31744
        %v371 = vsel %vm370, %v355, 0
        %v373 = vsel %vm370, %v357, 0
        %v375 = vsel %vm370, %v359, 0
        %v377 = vsel %vm370, %v361, 0
        %v379 = vsel %vm370, %v363, 0
        %v381 = vsel %vm370, %v365, 0
        %v383 = vsel %vm370, %v367, 0
        %v385 = vsel %vm370, %v369, 0
        %vm387 = vcmask 1043456
        %v389 = vsel %vm387, %v345, 0
        %391 = vmatprep.subr.mxu0 0.0
        %392 = vmatpush1.msra.mxu0 %v389
        %393 = vmatprep.subr.mxu0 0.0
        %394 = vmatpush1.msra.mxu0 0.0
        %395 = vmatprep.subr.mxu0 0.0
        %396 = vmatpush1.msra.mxu0 0.0
        %397 = vmatprep.subr.mxu0 0.0
        %398 = vmatpush1.msra.mxu0 0.0
        %399 = vmatprep.subr.mxu0 0.0
        %400 = vmatpush1.msra.mxu0 0.0
        %401 = vmatprep.subr.mxu0 0.0
        %402 = vmatpush1.msra.mxu0 0.0
        %403 = vmatprep.subr.mxu0 0.0
        %404 = vmatpush1.msra.mxu0 0.0
        %405 = vmatprep.subr.mxu0 0.0
        %406 = vmatpush1.msra.mxu0 0.0
        %407 = vmatprep.subr.mxu0 0.0
        %408 = vmatpush1.msra.mxu0 0.0
        %409 = vmatprep.subr.mxu0 0.0
        %410 = vmatpush1.msra.mxu0 0.0
        %411 = vmatprep.subr.mxu0 0.0
        %412 = vmatpush1.msra.mxu0 0.0
        %413 = vmatprep.subr.mxu0 0.0
        %414 = vmatpush1.msra.mxu0 0.0
        %415 = vmatprep.subr.mxu0 0.0
        %416 = vmatpush1.msra.mxu0 0.0
        %417 = vmatprep.subr.mxu0 0.0
        %418 = vmatpush1.msra.mxu0 0.0
        %419 = vmatprep.subr.mxu0 0.0
        %420 = vmatpush1.msra.mxu0 0.0
        %421 = vmatprep.subr.mxu0 0.0
        %422 = vmatpush1.msra.mxu0 0.0
        %423 = vmatprep.subr.mxu0 0.0
        %424 = vmatpush1.msra.mxu0 0.0
        %425 = vmatprep.subr.mxu0 0.0
        %426 = vmatpush1.msra.mxu0 0.0
        %427 = vmatprep.subr.mxu0 0.0
        %428 = vmatpush1.msra.mxu0 0.0
        %429 = vmatprep.subr.mxu0 0.0
        %430 = vmatpush1.msra.mxu0 0.0
        %431 = vmatprep.subr.mxu0 0.0
        %432 = vmatpush1.msra.mxu0 0.0
        %433 = vmatprep.subr.mxu0 0.0
        %434 = vmatpush1.msra.mxu0 0.0
        %435 = vmatprep.subr.mxu0 0.0
        %436 = vmatpush1.msra.mxu0 0.0
        %437 = vmatprep.subr.mxu0 0.0
        %438 = vmatpush1.msra.mxu0 0.0
        %439 = vmatprep.subr.mxu0 0.0
        %440 = vmatpush1.msra.mxu0 0.0
        %441 = vmatprep.subr.mxu0 0.0
        %442 = vmatpush1.msra.mxu0 0.0
        %443 = vmatprep.subr.mxu0 0.0
        %444 = vmatpush1.msra.mxu0 0.0
        %445 = vmatprep.subr.mxu0 0.0
        %446 = vmatpush1.msra.mxu0 0.0
        %447 = vmatprep.subr.mxu0 0.0
        %448 = vmatpush1.msra.mxu0 0.0
        %449 = vmatprep.subr.mxu0 0.0
        %450 = vmatpush1.msra.mxu0 0.0
        %451 = vmatprep.subr.mxu0 0.0
        %452 = vmatpush1.msra.mxu0 0.0
        %453 = vmatprep.subr.mxu0 0.0
        %454 = vmatpush1.msra.mxu0 0.0
        %455 = vmatprep.mubr.f32.mxu0 0.0
        %456 = vmatmul.mubr.f32.gmra.mrb[0].mxu0 %v371
        %v457 = vpop.f32.mrb[0].mxu0
        %v458 = vadd.f32 0.0, %v457
        %v459 = vpop.f32.mrb[0].mxu0
        %460 = vmatprep.mubr.f32.mxu0 0.0
        %461 = vmatmul.mubr.f32.gmra.mrb[0].mxu0 %v373
        %v462 = vpop.f32.mrb[0].mxu0
        %v463 = vadd.f32 0.0, %v462
        %v464 = vpop.f32.mrb[0].mxu0
        %465 = vmatprep.mubr.f32.mxu0 0.0
        %466 = vmatmul.mubr.f32.gmra.mrb[0].mxu0 %v375
        %v467 = vpop.f32.mrb[0].mxu0
        %v468 = vadd.f32 0.0, %v467
        %v469 = vpop.f32.mrb[0].mxu0
        %470 = vmatprep.mubr.f32.mxu0 0.0
        %471 = vmatmul.mubr.f32.gmra.mrb[0].mxu0 %v377
        %v472 = vpop.f32.mrb[0].mxu0
        %v473 = vadd.f32 0.0, %v472
        %v474 = vpop.f32.mrb[0].mxu0
        %475 = vmatprep.mubr.f32.mxu0 0.0
        %476 = vmatmul.mubr.f32.gmra.mrb[0].mxu0 %v379
        %v477 = vpop.f32.mrb[0].mxu0
        %v478 = vadd.f32 0.0, %v477
        %v479 = vpop.f32.mrb[0].mxu0
        %480 = vmatprep.mubr.f32.mxu0 0.0
        %481 = vmatmul.mubr.f32.gmra.mrb[0].mxu0 %v381
        %v482 = vpop.f32.mrb[0].mxu0
        %v483 = vadd.f32 0.0, %v482
        %v484 = vpop.f32.mrb[0].mxu0
        %485 = vmatprep.mubr.f32.mxu0 0.0
        %486 = vmatmul.mubr.f32.gmra.mrb[0].mxu0 %v383
        %v487 = vpop.f32.mrb[0].mxu0
        %v488 = vadd.f32 0.0, %v487
        %v489 = vpop.f32.mrb[0].mxu0
        %490 = vmatprep.mubr.f32.mxu0 0.0
        %491 = vmatmul.mubr.f32.gmra.mrb[0].mxu0 %v385
        %v492 = vpop.f32.mrb[0].mxu0
        %v493 = vadd.f32 0.0, %v492
        %v494 = vpop.f32.mrb[0].mxu0
        %495 = vdwg.mxu0
        %496 = vst.msk [vmem:[%s218] sm:$0xff] %vm370, %v458
        %497 = vst.msk [vmem:[%s218 + $0x8] sm:$0xff] %vm370, %v463
        %498 = vst.msk [vmem:[%s218 + $0x10] sm:$0xff] %vm370, %v468
        %499 = vst.msk [vmem:[%s218 + $0x18] sm:$0xff] %vm370, %v473
        %500 = vst.msk [vmem:[%s218 + $0x20] sm:$0xff] %vm370, %v478
        %501 = vst.msk [vmem:[%s218 + $0x28] sm:$0xff] %vm370, %v483
        %502 = vst.msk [vmem:[%s218 + $0x30] sm:$0xff] %vm370, %v488
        %503 = vst.msk [vmem:[%s218 + $0x38] sm:$0xff] %vm370, %v493
        %v504 = vsel %vm370, %v458, 0.0
        %v505 = vsel %vm370, %v463, 0.0
        %v506 = vadd.f32 %v504, %v505
        %v507 = vsel %vm370, %v468, 0.0
        %v508 = vadd.f32 %v506, %v507
        %v509 = vsel %vm370, %v473, 0.0
        %v510 = vadd.f32 %v508, %v509
        %v511 = vsel %vm370, %v478, 0.0
        %v512 = vadd.f32 %v510, %v511
        %v513 = vsel %vm370, %v483, 0.0
        %v514 = vadd.f32 %v512, %v513
        %v515 = vsel %vm370, %v488, 0.0
        %v516 = vadd.f32 %v514, %v515
        %v517 = vsel %vm370, %v493, 0.0
        %v518 = vadd.f32 %v516, %v517
        %v519 = vrot.slane %v518, 4
        %v520 = vadd.f32 %v518, %v519
        %v521 = vrot.slane %v520, 2
        %v522 = vadd.f32 %v520, %v521
        %v523 = vrot.slane %v522, 1
        %v524 = vadd.f32 %v522, %v523
        %vm525 = vcmask 24576
        %526 = vst.msk [vmem:[%s208] sm:$0x1] %vm525, %v524
        %v527 = vmul.f32 %v458, %v458
        %v528 = vmul.f32 %v463, %v463
        %v529 = vmul.f32 %v468, %v468
        %v530 = vmul.f32 %v473, %v473
        %v531 = vmul.f32 %v478, %v478
        %v532 = vmul.f32 %v483, %v483
        %v533 = vmul.f32 %v488, %v488
        %v534 = vmul.f32 %v493, %v493
        %v535 = vsel %vm370, %v527, 0.0
        %v536 = vsel %vm370, %v528, 0.0
        %v537 = vadd.f32 %v535, %v536
        %v538 = vsel %vm370, %v529, 0.0
        %v539 = vadd.f32 %v537, %v538
        %v540 = vsel %vm370, %v530, 0.0
        %v541 = vadd.f32 %v539, %v540
        %v542 = vsel %vm370, %v531, 0.0
        %v543 = vadd.f32 %v541, %v542
        %v544 = vsel %vm370, %v532, 0.0
        %v545 = vadd.f32 %v543, %v544
        %v546 = vsel %vm370, %v533, 0.0
        %v547 = vadd.f32 %v545, %v546
        %v548 = vsel %vm370, %v534, 0.0
        %v549 = vadd.f32 %v547, %v548
        %v550 = vrot.slane %v549, 4
        %v551 = vadd.f32 %v549, %v550
        %v552 = vrot.slane %v551, 2
        %v553 = vadd.f32 %v551, %v552
        %v554 = vrot.slane %v553, 1
        %v555 = vadd.f32 %v553, %v554
        %556 = vst.msk [vmem:[%s208 + $0x1] sm:$0x1] %vm525, %v555
        %p557 = scmp.lt.s32.totalorder %s22, 1
        %s558 = scalar_select %p557, %s22, 1
        %s559 = smul.addr %s558, 8
        %s560 = smul.addr %s559, 8
        %s561 = scalar_lea.vmem %s2, %s560
        %s562 = sand.u32 %s103, 1
        %s563 = scalar_lea.sflag [#allocation3], %s562
        %s564 = sand.u32 %s103, 1
        %s565 = smul.addr %s564, 2
        %s566 = scalar_lea.vmem [#allocation2], %s565
        %s567 = sand.u32 %s129, 1
        %s568 = scalar_lea.sflag [#allocation5], %s567
        %s569 = sand.u32 %s129, 1
        %s570 = smul.addr %s569, 2
        %s571 = scalar_lea.vmem [#allocation4], %s570
        // Predicated region
        $region29: #{tpu_custom_call.1} parent=27 // pred_check
          %p572 = pneg %p87
        $region30: #{tpu_custom_call.1} parent=27 // pred_check_branch
          %574 = sbr.rel (%p572) target = $region32
        $region31: #{tpu_custom_call.1} parent=27 // pred_region
          _
        $region32: #{tpu_custom_call.1} parent=27 // pred_fallthru
          _
        // Predicated region
        $region33: #{tpu_custom_call.1} parent=27 // pred_check
          %p575 = pneg %p113
        $region34: #{tpu_custom_call.1} parent=27 // pred_check_branch
          %577 = sbr.rel (%p575) target = $region36
        $region35: #{tpu_custom_call.1} parent=27 // pred_region
          %s579 = ssub.s32 32, 32
          %580 = vsyncadd %s563, %s579
          %s581 = smul.addr %s22, 32
          %s582 = scalar_lea.hbm %s3, %s581
          %s584 = sshll.u32 %s566, 4
          %s585 = int_to_ptr.vmem [resolvable:$true] %s584
          %587 = dma.vmem_to_hbm [thread:$0]  %s585, 32, %s582, %s563
        $region36: #{tpu_custom_call.1} parent=27 // pred_fallthru
          _
        // Predicated region
        $region37: #{tpu_custom_call.1} parent=27 // pred_check
          %p588 = pneg %p139
        $region38: #{tpu_custom_call.1} parent=27 // pred_check_branch
          %590 = sbr.rel (%p588) target = $region40
        $region39: #{tpu_custom_call.1} parent=27 // pred_region
          %s592 = ssub.s32 32, 32
          %593 = vsyncadd %s568, %s592
          %s594 = smul.addr %s22, 32
          %s595 = scalar_lea.hbm %s4, %s594
          %s597 = sshll.u32 %s571, 4
          %s598 = int_to_ptr.vmem [resolvable:$true] %s597
          %600 = dma.vmem_to_hbm [thread:$0]  %s598, 32, %s595, %s568
        $region40: #{tpu_custom_call.1} parent=27 // pred_fallthru
          _
      $region28: #{tpu_custom_call.1} parent=5 // pred_fallthru
        _
      %p601 = scmp.le.s32.totalorder 2, %s17
      // Predicated region
      $region41: #{tpu_custom_call.1} parent=5 // pred_check
        %p602 = pneg %p601
      $region42: #{tpu_custom_call.1} parent=5 // pred_check_branch
        %604 = sbr.rel (%p602) target = $region44
      $region43: #{tpu_custom_call.1} parent=5 // pred_region
        %s605 = ssub.s32 %s17, 2
        // Predicated region
        $region45: #{tpu_custom_call.1} parent=43 // pred_check
          %p606 = pneg %p93
        $region46: #{tpu_custom_call.1} parent=43 // pred_check_branch
          %608 = sbr.rel (%p606) target = $region48
        $region47: #{tpu_custom_call.1} parent=43 // pred_region
          %p609 = scmp.lt.s32.totalorder %s23, 1
          %s610 = scalar_select %p609, %s23, 1
          %s611 = smul.addr %s610, 8
          %s612 = smul.addr %s611, 8
          %s613 = scalar_lea.vmem %s2, %s612
        $region48: #{tpu_custom_call.1} parent=43 // pred_fallthru
          _
        // Predicated region
        $region49: #{tpu_custom_call.1} parent=43 // pred_check
          %p614 = pneg %p119
        $region50: #{tpu_custom_call.1} parent=43 // pred_check_branch
          %616 = sbr.rel (%p614) target = $region52
        $region51: #{tpu_custom_call.1} parent=43 // pred_region
          %s617 = sand.u32 %s104, 1
          %s618 = scalar_lea.sflag [#allocation3], %s617
          %s619 = sand.u32 %s104, 1
          %s620 = smul.addr %s619, 2
          %s621 = scalar_lea.vmem [#allocation2], %s620
          %622 = dma.done %s618, 32
        $region52: #{tpu_custom_call.1} parent=43 // pred_fallthru
          _
        // Predicated region
        $region53: #{tpu_custom_call.1} parent=43 // pred_check
          %p623 = pneg %p145
        $region54: #{tpu_custom_call.1} parent=43 // pred_check_branch
          %625 = sbr.rel (%p623) target = $region56
        $region55: #{tpu_custom_call.1} parent=43 // pred_region
          %s626 = sand.u32 %s130, 1
          %s627 = scalar_lea.sflag [#allocation5], %s626
          %s628 = sand.u32 %s130, 1
          %s629 = smul.addr %s628, 2
          %s630 = scalar_lea.vmem [#allocation4], %s629
          %631 = dma.done %s627, 32
        $region56: #{tpu_custom_call.1} parent=43 // pred_fallthru
          _
      $region44: #{tpu_custom_call.1} parent=5 // pred_fallthru
        _
    $region6: #{tpu_custom_call.1} parent=1 // loop_footer
      %s21 = sadd.s32 1, %s17
    $region7: #{tpu_custom_call.1} parent=1 // loop_footer_branch
      %16 = sbr.rel target = $region3
    $region8: #{tpu_custom_call.1} parent=1 // loop_exit
      _
    %632 = vsyncpa [#allocation3], 1
    %s633 = scalar_lea.sflag [#allocation3], 1
    %634 = vsyncpa %s633, 1
    %635 = vsyncpa [#allocation5], 1
    %s636 = scalar_lea.sflag [#allocation5], 1
    %637 = vsyncpa %s636, 1

</llo_original>
